<compile_context>
chip_gen: v5e
topology: v5e:2x2
jax: 0.10.0
libtpu: 0.0.40
codegen_flags: <defaults>
</compile_context>

<pallas_src>
import jax
import jax.numpy as jnp
from jax.experimental import pallas as pl
from jax.experimental.pallas import tpu as pltpu

EPS = 1e-5
LANES = 128                       # lane-pad every channel dim to this
AFFINE_ROWS = 16                  # gamma/beta (or bias) live in a 16-row tail
SLAB_ROWS = LANES + AFFINE_ROWS   # 144 rows per layer (multiple of 16: bf16 tile)
CHANNEL_LIST = (16, 32, 32, 64)
N_LAYERS = len(CHANNEL_LIST) - 1  # 3


def mlp_kernel(x_ref, p_ref, o_ref):
    inv_n = 1.0 / float(x_ref.shape[0])  # static

    def weight(layer):
        base = layer * SLAB_ROWS
        return p_ref[base:base + LANES, :]                          # [128,128] bf16

    def affine(layer):
        base = layer * SLAB_ROWS + LANES
        tail = p_ref[base:base + AFFINE_ROWS, :].astype(jnp.float32)  # [16,128] f32
        return tail[0:1, :], tail[1:2, :]                             # gamma, beta

    def hidden_layer(h_in, layer):
        # Linear (bias dropped: absorbed by training-mode BN mean subtraction).
        h = jnp.dot(h_in, weight(layer), preferred_element_type=jnp.float32)
        gamma, beta = affine(layer)
        # One-pass training-mode BatchNorm1d stats (biased variance), f32.
        s = jnp.sum(h, axis=0, keepdims=True)
        ss = jnp.sum(h * h, axis=0, keepdims=True)
        mean = s * inv_n
        var = jnp.maximum(ss * inv_n - mean * mean, 0.0)  # clamp cancellation < 0
        scale = jax.lax.rsqrt(var + EPS) * gamma
        shift = beta - mean * scale                        # fused BN affine
        # act_first=False -> relu after norm; dropout p=0 -> identity.
        return jnp.maximum(h * scale + shift, 0.0).astype(jnp.bfloat16)

    h = hidden_layer(x_ref[...], 0)
    h = hidden_layer(h, 1)

    # Last layer (plain_last=True): Linear only; dropout p=0 -> identity.
    b3, _ = affine(2)
    o_ref[...] = jnp.dot(h, weight(2), preferred_element_type=jnp.float32) + b3


def pack_params(params):
    """Pack all layer parameters into one bf16 [3*144, 128] slab. Call ONCE."""
    (w1, b1, g1, be1, w2, b2, g2, be2, w3, b3) = params
    del b1, b2  # hidden Linear biases cancelled exactly by training-mode BN

    slab = jnp.zeros((N_LAYERS * SLAB_ROWS, LANES), jnp.float32)

    def put(slab, layer, w, row0, row1=None):
        base = layer * SLAB_ROWS
        cin, cout = w.shape
        slab = slab.at[base:base + cin, :cout].set(w)
        slab = slab.at[base + LANES, :cout].set(row0)
        if row1 is not None:
            slab = slab.at[base + LANES + 1, :cout].set(row1)
        return slab

    slab = put(slab, 0, w1, g1[0], be1[0])   # W1 | gamma1 | beta1
    slab = put(slab, 1, w2, g2[0], be2[0])   # W2 | gamma2 | beta2
    slab = put(slab, 2, w3, b3[0])           # W3 | bias3
    return slab.astype(jnp.bfloat16)


@jax.jit
def mlp_forward(x, param_slab):
    n, cin = x.shape
    # Lane-pad + bf16-cast x (fused into this jit; the only wrapper-side op).
    x_pad = jnp.zeros((n, LANES), jnp.bfloat16).at[:, :cin].set(
        x.astype(jnp.bfloat16))

    vmem = pl.BlockSpec(memory_space=pltpu.MemorySpace.VMEM)
    out_pad = pl.pallas_call(
        mlp_kernel,
        out_shape=jax.ShapeDtypeStruct((n, LANES), jnp.float32),
        in_specs=[vmem, vmem],   # 2 input DMAs: x + one combined parameter slab
        out_specs=vmem,
    )(x_pad, param_slab)

    # TODO(synk): drop this slice if consumers accept a lane-padded [N,128] output.
    return out_pad[:, :CHANNEL_LIST[-1]]


def mlp_reference(x, params):
    # Pure-JAX f32 reference with the ORIGINAL (unpadded, biased) parameters.
    (w1, b1, g1, be1, w2, b2, g2, be2, w3, b3) = params

    def bn_relu(h, g, be):
        m = jnp.mean(h, axis=0, keepdims=True)
        v = jnp.mean((h - m) ** 2, axis=0, keepdims=True)
        return jnp.maximum((h - m) / jnp.sqrt(v + EPS) * g + be, 0.0)

    h = bn_relu(x @ w1 + b1, g1, be1)
    h = bn_relu(h @ w2 + b2, g2, be2)
    return h @ w3 + b3


def init_params(key, channel_list):
    params = []
    n_layers = len(channel_list) - 1
    keys = jax.random.split(key, 2 * n_layers)
    for i, (cin, cout) in enumerate(zip(channel_list[:-1], channel_list[1:])):
        scale = 1.0 / jnp.sqrt(jnp.float32(cin))
        w = jax.random.uniform(keys[2 * i], (cin, cout), jnp.float32,
                               minval=-scale, maxval=scale)
        b = jax.random.uniform(keys[2 * i + 1], (1, cout), jnp.float32,
                               minval=-scale, maxval=scale)
        params.append(w)
        params.append(b)
        if i < n_layers - 1:  # plain_last=True -> no norm on last layer
            params.append(jnp.ones((1, cout), jnp.float32))   # gamma
            params.append(jnp.zeros((1, cout), jnp.float32))  # beta
    return tuple(params)


if __name__ == "__main__":
    N = 64

    key = jax.random.PRNGKey(0)
    kx, kp = jax.random.split(key)
    x = jax.random.normal(kx, (N, CHANNEL_LIST[0]), jnp.float32)
    params = init_params(kp, CHANNEL_LIST)

    # Pack parameters ONCE (parameter-load time), not per forward call.
    param_slab = jax.block_until_ready(pack_params(params))

    out = mlp_forward(x, param_slab)
    jax.block_until_ready(out)

    ref = mlp_reference(x, params)
    assert out.shape == (N, CHANNEL_LIST[-1])
    # bf16 MXU weights/activations (f32 accumulation + f32 BN math) vs the pure
    # f32 reference: tolerance loosened to bf16-appropriate levels.
    assert jnp.allclose(out, ref, atol=5e-2, rtol=5e-2), "mismatch vs reference"

    # TODO(synk): dropout with p>0 (training) would need pltpu.prng_* bits; p=0 here.
    # TODO(synk): eval-mode BN (running stats) not implemented; module default is training mode.
    print("KERNEL_OK")
</pallas_src>

<mosaic_0001>
module attributes {stable_mosaic.version = 11 : i64} {
  func.func @mlp_kernel(%arg0: memref<64x128xbf16, #tpu.memory_space<vmem>>, %arg1: memref<432x128xbf16, #tpu.memory_space<vmem>>, %arg2: memref<64x128xf32, #tpu.memory_space<vmem>>) attributes {dimension_semantics = [], scalar_prefetch = 0 : i64, scratch_operands = 0 : i64, tpu.core_type = #tpu.core_type<tc>} {
    %c0 = arith.constant 0 : index
    %c0_0 = arith.constant 0 : index
    %0 = vector.load %arg0[%c0, %c0_0] : memref<64x128xbf16, #tpu.memory_space<vmem>>, vector<64x128xbf16>
    %c0_1 = arith.constant 0 : index
    %c0_2 = arith.constant 0 : index
    %1 = vector.load %arg1[%c0_1, %c0_2] : memref<432x128xbf16, #tpu.memory_space<vmem>>, vector<128x128xbf16>
    %cst = arith.constant dense<0.000000e+00> : vector<64x128xf32>
    %2 = tpu.matmul %0, %1, %cst {dimension_numbers = #tpu.dot_dimension_numbers<[1], [0], [0], [1], [0, 0, 1, 1], [], []>} : vector<64x128xbf16>, vector<128x128xbf16>, vector<64x128xf32> -> vector<64x128xf32>
    %c128 = arith.constant 128 : index
    %c0_3 = arith.constant 0 : index
    %3 = vector.load %arg1[%c128, %c0_3] : memref<432x128xbf16, #tpu.memory_space<vmem>>, vector<16x128xbf16>
    %4 = arith.extf %3 : vector<16x128xbf16> to vector<16x128xf32>
    %5 = vector.extract_strided_slice %4 {offsets = [0, 0], sizes = [1, 128], strides = [1, 1]} : vector<16x128xf32> to vector<1x128xf32>
    %6 = vector.extract_strided_slice %4 {offsets = [1, 0], sizes = [1, 128], strides = [1, 1]} : vector<16x128xf32> to vector<1x128xf32>
    %cst_4 = arith.constant dense<0.000000e+00> : vector<128xf32>
    %7 = vector.multi_reduction <add>, %2, %cst_4 [0] : vector<64x128xf32> to vector<128xf32>
    %8 = vector.shape_cast %7 : vector<128xf32> to vector<1x128xf32>
    %9 = arith.mulf %2, %2 : vector<64x128xf32>
    %cst_5 = arith.constant dense<0.000000e+00> : vector<128xf32>
    %10 = vector.multi_reduction <add>, %9, %cst_5 [0] : vector<64x128xf32> to vector<128xf32>
    %11 = vector.shape_cast %10 : vector<128xf32> to vector<1x128xf32>
    %cst_6 = arith.constant 1.562500e-02 : f32
    %12 = vector.broadcast %cst_6 : f32 to vector<1x128xf32>
    %13 = arith.mulf %8, %12 : vector<1x128xf32>
    %cst_7 = arith.constant 1.562500e-02 : f32
    %14 = vector.broadcast %cst_7 : f32 to vector<1x128xf32>
    %15 = arith.mulf %11, %14 : vector<1x128xf32>
    %16 = arith.mulf %13, %13 : vector<1x128xf32>
    %17 = arith.subf %15, %16 : vector<1x128xf32>
    %cst_8 = arith.constant 0.000000e+00 : f32
    %18 = vector.broadcast %cst_8 : f32 to vector<1x128xf32>
    %19 = arith.maximumf %17, %18 : vector<1x128xf32>
    %cst_9 = arith.constant 9.99999974E-6 : f32
    %20 = vector.broadcast %cst_9 : f32 to vector<1x128xf32>
    %21 = arith.addf %19, %20 : vector<1x128xf32>
    %22 = math.rsqrt %21 : vector<1x128xf32>
    %23 = arith.mulf %22, %5 : vector<1x128xf32>
    %24 = arith.mulf %13, %23 : vector<1x128xf32>
    %25 = arith.subf %6, %24 : vector<1x128xf32>
    %26 = vector.broadcast %23 : vector<1x128xf32> to vector<64x128xf32>
    %27 = arith.mulf %2, %26 : vector<64x128xf32>
    %28 = vector.broadcast %25 : vector<1x128xf32> to vector<64x128xf32>
    %29 = arith.addf %27, %28 : vector<64x128xf32>
    %cst_10 = arith.constant 0.000000e+00 : f32
    %30 = vector.broadcast %cst_10 : f32 to vector<64x128xf32>
    %31 = arith.maximumf %29, %30 : vector<64x128xf32>
    %32 = arith.truncf %31 : vector<64x128xf32> to vector<64x128xbf16>
    %c144 = arith.constant 144 : index
    %c0_11 = arith.constant 0 : index
    %33 = vector.load %arg1[%c144, %c0_11] : memref<432x128xbf16, #tpu.memory_space<vmem>>, vector<128x128xbf16>
    %cst_12 = arith.constant dense<0.000000e+00> : vector<64x128xf32>
    %34 = tpu.matmul %32, %33, %cst_12 {dimension_numbers = #tpu.dot_dimension_numbers<[1], [0], [0], [1], [0, 0, 1, 1], [], []>} : vector<64x128xbf16>, vector<128x128xbf16>, vector<64x128xf32> -> vector<64x128xf32>
    %c272 = arith.constant 272 : index
    %c0_13 = arith.constant 0 : index
    %35 = vector.load %arg1[%c272, %c0_13] : memref<432x128xbf16, #tpu.memory_space<vmem>>, vector<16x128xbf16>
    %36 = arith.extf %35 : vector<16x128xbf16> to vector<16x128xf32>
    %37 = vector.extract_strided_slice %36 {offsets = [0, 0], sizes = [1, 128], strides = [1, 1]} : vector<16x128xf32> to vector<1x128xf32>
    %38 = vector.extract_strided_slice %36 {offsets = [1, 0], sizes = [1, 128], strides = [1, 1]} : vector<16x128xf32> to vector<1x128xf32>
    %cst_14 = arith.constant dense<0.000000e+00> : vector<128xf32>
    %39 = vector.multi_reduction <add>, %34, %cst_14 [0] : vector<64x128xf32> to vector<128xf32>
    %40 = vector.shape_cast %39 : vector<128xf32> to vector<1x128xf32>
    %41 = arith.mulf %34, %34 : vector<64x128xf32>
    %cst_15 = arith.constant dense<0.000000e+00> : vector<128xf32>
    %42 = vector.multi_reduction <add>, %41, %cst_15 [0] : vector<64x128xf32> to vector<128xf32>
    %43 = vector.shape_cast %42 : vector<128xf32> to vector<1x128xf32>
    %cst_16 = arith.constant 1.562500e-02 : f32
    %44 = vector.broadcast %cst_16 : f32 to vector<1x128xf32>
    %45 = arith.mulf %40, %44 : vector<1x128xf32>
    %cst_17 = arith.constant 1.562500e-02 : f32
    %46 = vector.broadcast %cst_17 : f32 to vector<1x128xf32>
    %47 = arith.mulf %43, %46 : vector<1x128xf32>
    %48 = arith.mulf %45, %45 : vector<1x128xf32>
    %49 = arith.subf %47, %48 : vector<1x128xf32>
    %cst_18 = arith.constant 0.000000e+00 : f32
    %50 = vector.broadcast %cst_18 : f32 to vector<1x128xf32>
    %51 = arith.maximumf %49, %50 : vector<1x128xf32>
    %cst_19 = arith.constant 9.99999974E-6 : f32
    %52 = vector.broadcast %cst_19 : f32 to vector<1x128xf32>
    %53 = arith.addf %51, %52 : vector<1x128xf32>
    %54 = math.rsqrt %53 : vector<1x128xf32>
    %55 = arith.mulf %54, %37 : vector<1x128xf32>
    %56 = arith.mulf %45, %55 : vector<1x128xf32>
    %57 = arith.subf %38, %56 : vector<1x128xf32>
    %58 = vector.broadcast %55 : vector<1x128xf32> to vector<64x128xf32>
    %59 = arith.mulf %34, %58 : vector<64x128xf32>
    %60 = vector.broadcast %57 : vector<1x128xf32> to vector<64x128xf32>
    %61 = arith.addf %59, %60 : vector<64x128xf32>
    %cst_20 = arith.constant 0.000000e+00 : f32
    %62 = vector.broadcast %cst_20 : f32 to vector<64x128xf32>
    %63 = arith.maximumf %61, %62 : vector<64x128xf32>
    %64 = arith.truncf %63 : vector<64x128xf32> to vector<64x128xbf16>
    %c416 = arith.constant 416 : index
    %c0_21 = arith.constant 0 : index
    %65 = vector.load %arg1[%c416, %c0_21] : memref<432x128xbf16, #tpu.memory_space<vmem>>, vector<16x128xbf16>
    %66 = arith.extf %65 : vector<16x128xbf16> to vector<16x128xf32>
    %67 = vector.extract_strided_slice %66 {offsets = [0, 0], sizes = [1, 128], strides = [1, 1]} : vector<16x128xf32> to vector<1x128xf32>
    %c288 = arith.constant 288 : index
    %c0_22 = arith.constant 0 : index
    %68 = vector.load %arg1[%c288, %c0_22] : memref<432x128xbf16, #tpu.memory_space<vmem>>, vector<128x128xbf16>
    %cst_23 = arith.constant dense<0.000000e+00> : vector<64x128xf32>
    %69 = tpu.matmul %64, %68, %cst_23 {dimension_numbers = #tpu.dot_dimension_numbers<[1], [0], [0], [1], [0, 0, 1, 1], [], []>} : vector<64x128xbf16>, vector<128x128xbf16>, vector<64x128xf32> -> vector<64x128xf32>
    %70 = vector.broadcast %67 : vector<1x128xf32> to vector<64x128xf32>
    %71 = arith.addf %69, %70 : vector<64x128xf32>
    %c0_24 = arith.constant 0 : index
    %c0_25 = arith.constant 0 : index
    %72 = vector.load %arg2[%c0_24, %c0_25] : memref<64x128xf32, #tpu.memory_space<vmem>>, vector<64x128xf32>
    tpu.vector_store %arg2[%c0_24, %c0_25], %71 {strides = array<i32>} : memref<64x128xf32, #tpu.memory_space<vmem>>, vector<64x128xf32>,
    return
  }
}

</mosaic_0001>

<llo_original>
// kernel: mlp_forward.1
$region0: #{mlp_forward.1}
  #allocation0 [shape = 'u32[]', space=smem, size = 0x4, offset = 0x4, fixed_abs, tag = 'smem constant byte address 0x4 - core index']
  #allocation1 [shape = 'u32[72,128]{1,0:T(1,128)}', space=vmem, size = 0x9000, scoped, tag = 'internal scratch']
  %s0 = inlined_call_operand.vmem [shape: bf16[64,128], index: 0, kind: input, shape index: {}]
  %s1 = inlined_call_operand.hbm [shape: bf16[432,128], index: 1, kind: input, shape index: {}]
  %s2 = inlined_call_operand.hbm [shape: f32[64,128], index: 2, kind: output, shape index: {}]
  %s3 = sld [smem:[#allocation0]]
  $region22: #{mlp_forward.1} parent=0
    _
  %s5 = ssub.s32 1, %s3
  %s6 = scalar_select 0, %s5, %s3
  $region1: #{mlp_forward.1} parent=0
    #allocation2 [shape = 'u8[110592]{0}', space=vmem, size = 0x1b000, scoped, tag = 'input window, operand 1, single buffered']
    #allocation3 [shape = 's32[1]{0}', space=sflag, size = 0x4, scoped, tag = 'scoped memory for mlp_forward.1']
    #allocation4 [shape = 's32[1]{0}', space=sflag, size = 0x4, scoped, tag = 'scoped memory for mlp_forward.1']
    #allocation5 [shape = 'u8[32768]{0}', space=vmem, size = 0x8000, scoped, tag = 'output window, operand 0, single buffered']
    %7 = vsyncpa [#allocation3], 0
    %8 = vsyncpa [#allocation4], 0
    // Predicated region
    $region2: #{mlp_forward.1} parent=1 // pred_check
      _
    $region3: #{mlp_forward.1} parent=1 // pred_check_branch
      %10 = sbr.rel (0) target = $region5
    $region4: #{mlp_forward.1} parent=1 // pred_region
      _
    $region5: #{mlp_forward.1} parent=1 // pred_fallthru
      _
    // Predicated region
    $region6: #{mlp_forward.1} parent=1 // pred_check
      _
    $region7: #{mlp_forward.1} parent=1 // pred_check_branch
      %12 = sbr.rel (0) target = $region9
    $region8: #{mlp_forward.1} parent=1 // pred_region
      %14 = vsyncadd [#allocation3], 0
      %s15 = sshll.u32 %s1, 4
      %s16 = int_to_ptr.hbm [resolvable:$true] %s15
      %s17 = sshll.u32 [#allocation2], 4
      %s18 = int_to_ptr.vmem [resolvable:$true] %s17
      %23 = dma.hbm_to_vmem [thread:$0]  %s16, 3456, %s18, [#allocation3], 64, 64, 4
    $region9: #{mlp_forward.1} parent=1 // pred_fallthru
      _
    // Predicated region
    $region10: #{mlp_forward.1} parent=1 // pred_check
      _
    $region11: #{mlp_forward.1} parent=1 // pred_check_branch
      %25 = sbr.rel (0) target = $region13
    $region12: #{mlp_forward.1} parent=1 // pred_region
      %27 = dma.done [#allocation3], 3456
    $region13: #{mlp_forward.1} parent=1 // pred_fallthru
      _
    %v28 = vld [vmem:[%s0] sm:$0xf]
    %v29 = vld [vmem:[%s0 + $0x4] sm:$0xf]
    %v30 = vld [vmem:[%s0 + $0x8] sm:$0xf]
    %v31 = vld [vmem:[%s0 + $0xc] sm:$0xf]
    %v32 = vld [vmem:[%s0 + $0x10] sm:$0xf]
    %v33 = vld [vmem:[%s0 + $0x14] sm:$0xf]
    %v34 = vld [vmem:[%s0 + $0x18] sm:$0xf]
    %v35 = vld [vmem:[%s0 + $0x1c] sm:$0xf]
    %v36 = vld [vmem:[#allocation2] sm:$0xf]
    %v37 = vld [vmem:[#allocation2 + $0x4] sm:$0xf]
    %v38 = vld [vmem:[#allocation2 + $0x8] sm:$0xf]
    %v39 = vld [vmem:[#allocation2 + $0xc] sm:$0xf]
    %v40 = vld [vmem:[#allocation2 + $0x10] sm:$0xf]
    %v41 = vld [vmem:[#allocation2 + $0x14] sm:$0xf]
    %v42 = vld [vmem:[#allocation2 + $0x18] sm:$0xf]
    %v43 = vld [vmem:[#allocation2 + $0x1c] sm:$0xf]
    %v44 = vld [vmem:[#allocation2 + $0x20] sm:$0xf]
    %v45 = vld [vmem:[#allocation2 + $0x24] sm:$0xf]
    %v46 = vld [vmem:[#allocation2 + $0x28] sm:$0xf]
    %v47 = vld [vmem:[#allocation2 + $0x2c] sm:$0xf]
    %v48 = vld [vmem:[#allocation2 + $0x30] sm:$0xf]
    %v49 = vld [vmem:[#allocation2 + $0x34] sm:$0xf]
    %v50 = vld [vmem:[#allocation2 + $0x38] sm:$0xf]
    %v51 = vld [vmem:[#allocation2 + $0x3c] sm:$0xf]
    %v60 = vunpack.c.l.b16 %v28
    %v61 = vunpack.c.l.b16 %v29
    %v62 = vunpack.c.l.b16 %v30
    %v63 = vunpack.c.l.b16 %v31
    %v64 = vunpack.c.l.b16 %v32
    %v65 = vunpack.c.l.b16 %v33
    %v66 = vunpack.c.l.b16 %v34
    %v67 = vunpack.c.l.b16 %v35
    %v68 = vpack.c.b16 %v61, %v60
    %v69 = vpack.c.b16 %v63, %v62
    %v70 = vpack.c.b16 %v65, %v64
    %v71 = vpack.c.b16 %v67, %v66
    %v92 = vunpack.c.l.b16 %v36
    %v93 = vunpack.c.l.b16 %v37
    %v94 = vunpack.c.l.b16 %v38
    %v95 = vunpack.c.l.b16 %v39
    %v96 = vunpack.c.l.b16 %v40
    %v97 = vunpack.c.l.b16 %v41
    %v98 = vunpack.c.l.b16 %v42
    %v99 = vunpack.c.l.b16 %v43
    %v100 = vunpack.c.l.b16 %v44
    %v101 = vunpack.c.l.b16 %v45
    %v102 = vunpack.c.l.b16 %v46
    %v103 = vunpack.c.l.b16 %v47
    %v104 = vunpack.c.l.b16 %v48
    %v105 = vunpack.c.l.b16 %v49
    %v106 = vunpack.c.l.b16 %v50
    %v107 = vunpack.c.l.b16 %v51
    %v108 = vpack.c.b16 %v93, %v92
    %v109 = vpack.c.b16 %v95, %v94
    %v110 = vpack.c.b16 %v97, %v96
    %v111 = vpack.c.b16 %v99, %v98
    %v112 = vpack.c.b16 %v101, %v100
    %v113 = vpack.c.b16 %v103, %v102
    %v114 = vpack.c.b16 %v105, %v104
    %v115 = vpack.c.b16 %v107, %v106
    %124 = vmatpush.bf16.msra.mxu0 %v115
    %125 = vmatpush.bf16.msra.mxu0 %v114
    %126 = vmatpush.bf16.msra.mxu0 %v113
    %127 = vmatpush.bf16.msra.mxu0 %v112
    %128 = vmatpush.bf16.msra.mxu0 %v111
    %129 = vmatpush.bf16.msra.mxu0 %v110
    %130 = vmatpush.bf16.msra.mxu0 %v109
    %131 = vmatpush.bf16.msra.mxu0 %v108
    %132 = vmatmul.bf16.gmra.mxu0 %v68
    %v133 = vpop.f32.mrf.mxu0
    %v134 = vadd.f32 0.0, %v133
    %v135 = vpop.f32.mrf.mxu0
    %v136 = vadd.f32 0.0, %v135
    %137 = vmatmul.bf16.gmra.mxu0 %v69
    %v138 = vpop.f32.mrf.mxu0
    %v139 = vadd.f32 0.0, %v138
    %v140 = vpop.f32.mrf.mxu0
    %v141 = vadd.f32 0.0, %v140
    %142 = vmatmul.bf16.gmra.mxu0 %v70
    %v143 = vpop.f32.mrf.mxu0
    %v144 = vadd.f32 0.0, %v143
    %v145 = vpop.f32.mrf.mxu0
    %v146 = vadd.f32 0.0, %v145
    %147 = vmatmul.bf16.gmra.mxu0 %v71
    %v148 = vpop.f32.mrf.mxu0
    %v149 = vadd.f32 0.0, %v148
    %v150 = vpop.f32.mrf.mxu0
    %v151 = vadd.f32 0.0, %v150
    %152 = vdwg.mxu0
    %v153 = vld [vmem:[#allocation2 + $0x40] sm:$0xf]
    %v154 = vunpack.c.l.bf16 %v153
    %v155 = vadd.f32 %v134, %v136
    %v156 = vadd.f32 %v155, %v139
    %v157 = vadd.f32 %v156, %v141
    %v158 = vadd.f32 %v157, %v144
    %v159 = vadd.f32 %v158, %v146
    %v160 = vadd.f32 %v159, %v149
    %v161 = vadd.f32 %v160, %v151
    %v162 = vrot.slane %v161, 4
    %v163 = vadd.f32 %v161, %v162
    %v164 = vrot.slane %v163, 2
    %v165 = vadd.f32 %v163, %v164
    %v166 = vrot.slane %v165, 1
    %v167 = vadd.f32 %v165, %v166
    %v168 = vmul.f32 %v134, %v134
    %v169 = vmul.f32 %v136, %v136
    %v170 = vmul.f32 %v139, %v139
    %v171 = vmul.f32 %v141, %v141
    %v172 = vmul.f32 %v144, %v144
    %v173 = vmul.f32 %v146, %v146
    %v174 = vmul.f32 %v149, %v149
    %v175 = vmul.f32 %v151, %v151
    %v176 = vadd.f32 %v168, %v169
    %v177 = vadd.f32 %v176, %v170
    %v178 = vadd.f32 %v177, %v171
    %v179 = vadd.f32 %v178, %v172
    %v180 = vadd.f32 %v179, %v173
    %v181 = vadd.f32 %v180, %v174
    %v182 = vadd.f32 %v181, %v175
    %v183 = vrot.slane %v182, 4
    %v184 = vadd.f32 %v182, %v183
    %v185 = vrot.slane %v184, 2
    %v186 = vadd.f32 %v184, %v185
    %v187 = vrot.slane %v186, 1
    %v188 = vadd.f32 %v186, %v187
    %v189 = vmul.f32 %v167, 0.015625
    %v190 = vmul.f32 %v188, 0.015625
    %v191 = vmul.f32 %v189, %v189
    %v192 = vsub.f32 %v190, %v191
    %v193 = vmax.f32 %v192, 0.0
    %v194 = vadd.f32 %v193, 1e-05
    %v195 = vrsqrt.pop %v194
    %v196 = vmul.f32 %v195, %v194
    %v197 = vmul.f32 %v196, %v195
    %v198 = vmul.f32 0.5, %v197
    %v199 = vsub.f32 1.5, %v198
    %v200 = vmul.f32 %v195, %v199
    %vm201 = vweird.f32 %v194
    %vm202 = vweird.f32 %v195
    %vm203 = vmor %vm201, %vm202
    %v204 = vsel %vm203, %v195, %v200
    %v205 = vmul.f32 %v204, %v154
    %v206 = vmul.f32 %v189, %v205
    %v208 = vrot.slane %v206, 7
    %v210 = vsub.f32 %v154, %v208
    %v211 = vperm.slane %v205, 0
    %v212 = vmul.f32 %v134, %v211
    %v213 = vmul.f32 %v136, %v211
    %v214 = vmul.f32 %v139, %v211
    %v215 = vmul.f32 %v141, %v211
    %v216 = vmul.f32 %v144, %v211
    %v217 = vmul.f32 %v146, %v211
    %v218 = vmul.f32 %v149, %v211
    %v219 = vmul.f32 %v151, %v211
    %v220 = vperm.slane %v210, 1
    %v221 = vadd.f32 %v212, %v220
    %v222 = vadd.f32 %v213, %v220
    %v223 = vadd.f32 %v214, %v220
    %v224 = vadd.f32 %v215, %v220
    %v225 = vadd.f32 %v216, %v220
    %v226 = vadd.f32 %v217, %v220
    %v227 = vadd.f32 %v218, %v220
    %v228 = vadd.f32 %v219, %v220
    %v229 = vmax.f32 %v221, 0.0
    %v230 = vmax.f32 %v222, 0.0
    %v231 = vmax.f32 %v223, 0.0
    %v232 = vmax.f32 %v224, 0.0
    %v233 = vmax.f32 %v225, 0.0
    %v234 = vmax.f32 %v226, 0.0
    %v235 = vmax.f32 %v227, 0.0
    %v236 = vmax.f32 %v228, 0.0
    %v237 = vpack.c.bf16 %v230, %v229
    %v238 = vpack.c.bf16 %v232, %v231
    %v239 = vpack.c.bf16 %v234, %v233
    %v240 = vpack.c.bf16 %v236, %v235
    %v241 = vld [vmem:[#allocation2 + $0x48] sm:$0xf]
    %v242 = vld [vmem:[#allocation2 + $0x4c] sm:$0xf]
    %v243 = vld [vmem:[#allocation2 + $0x50] sm:$0xf]
    %v244 = vld [vmem:[#allocation2 + $0x54] sm:$0xf]
    %v245 = vld [vmem:[#allocation2 + $0x58] sm:$0xf]
    %v246 = vld [vmem:[#allocation2 + $0x5c] sm:$0xf]
    %v247 = vld [vmem:[#allocation2 + $0x60] sm:$0xf]
    %v248 = vld [vmem:[#allocation2 + $0x64] sm:$0xf]
    %v249 = vld [vmem:[#allocation2 + $0x68] sm:$0xf]
    %v250 = vld [vmem:[#allocation2 + $0x6c] sm:$0xf]
    %v251 = vld [vmem:[#allocation2 + $0x70] sm:$0xf]
    %v252 = vld [vmem:[#allocation2 + $0x74] sm:$0xf]
    %v253 = vld [vmem:[#allocation2 + $0x78] sm:$0xf]
    %v254 = vld [vmem:[#allocation2 + $0x7c] sm:$0xf]
    %v255 = vld [vmem:[#allocation2 + $0x80] sm:$0xf]
    %v256 = vld [vmem:[#allocation2 + $0x84] sm:$0xf]
    %v273 = vunpack.c.l.b16 %v241
    %v274 = vunpack.c.l.b16 %v242
    %v275 = vunpack.c.l.b16 %v243
    %v276 = vunpack.c.l.b16 %v244
    %v277 = vunpack.c.l.b16 %v245
    %v278 = vunpack.c.l.b16 %v246
    %v279 = vunpack.c.l.b16 %v247
    %v280 = vunpack.c.l.b16 %v248
    %v281 = vunpack.c.l.b16 %v249
    %v282 = vunpack.c.l.b16 %v250
    %v283 = vunpack.c.l.b16 %v251
    %v284 = vunpack.c.l.b16 %v252
    %v285 = vunpack.c.l.b16 %v253
    %v286 = vunpack.c.l.b16 %v254
    %v287 = vunpack.c.l.b16 %v255
    %v288 = vunpack.c.l.b16 %v256
    %v289 = vpack.c.b16 %v274, %v273
    %v290 = vpack.c.b16 %v276, %v275
    %v291 = vpack.c.b16 %v278, %v277
    %v292 = vpack.c.b16 %v280, %v279
    %v293 = vpack.c.b16 %v282, %v281
    %v294 = vpack.c.b16 %v284, %v283
    %v295 = vpack.c.b16 %v286, %v285
    %v296 = vpack.c.b16 %v288, %v287
    %305 = vmatpush.bf16.msra.mxu0 %v296
    %306 = vmatpush.bf16.msra.mxu0 %v295
    %307 = vmatpush.bf16.msra.mxu0 %v294
    %308 = vmatpush.bf16.msra.mxu0 %v293
    %309 = vmatpush.bf16.msra.mxu0 %v292
    %310 = vmatpush.bf16.msra.mxu0 %v291
    %311 = vmatpush.bf16.msra.mxu0 %v290
    %312 = vmatpush.bf16.msra.mxu0 %v289
    %313 = vmatmul.bf16.gmra.mxu0 %v237
    %v314 = vpop.f32.mrf.mxu0
    %v315 = vadd.f32 0.0, %v314
    %v316 = vpop.f32.mrf.mxu0
    %v317 = vadd.f32 0.0, %v316
    %318 = vmatmul.bf16.gmra.mxu0 %v238
    %v319 = vpop.f32.mrf.mxu0
    %v320 = vadd.f32 0.0, %v319
    %v321 = vpop.f32.mrf.mxu0
    %v322 = vadd.f32 0.0, %v321
    %323 = vmatmul.bf16.gmra.mxu0 %v239
    %v324 = vpop.f32.mrf.mxu0
    %v325 = vadd.f32 0.0, %v324
    %v326 = vpop.f32.mrf.mxu0
    %v327 = vadd.f32 0.0, %v326
    %328 = vmatmul.bf16.gmra.mxu0 %v240
    %v329 = vpop.f32.mrf.mxu0
    %v330 = vadd.f32 0.0, %v329
    %v331 = vpop.f32.mrf.mxu0
    %v332 = vadd.f32 0.0, %v331
    %333 = vdwg.mxu0
    %v334 = vld [vmem:[#allocation2 + $0x88] sm:$0xf]
    %v335 = vunpack.c.l.bf16 %v334
    %v336 = vadd.f32 %v315, %v317
    %v337 = vadd.f32 %v336, %v320
    %v338 = vadd.f32 %v337, %v322
    %v339 = vadd.f32 %v338, %v325
    %v340 = vadd.f32 %v339, %v327
    %v341 = vadd.f32 %v340, %v330
    %v342 = vadd.f32 %v341, %v332
    %v343 = vrot.slane %v342, 4
    %v344 = vadd.f32 %v342, %v343
    %v345 = vrot.slane %v344, 2
    %v346 = vadd.f32 %v344, %v345
    %v347 = vrot.slane %v346, 1
    %v348 = vadd.f32 %v346, %v347
    %v349 = vmul.f32 %v315, %v315
    %v350 = vmul.f32 %v317, %v317
    %v351 = vmul.f32 %v320, %v320
    %v352 = vmul.f32 %v322, %v322
    %v353 = vmul.f32 %v325, %v325
    %v354 = vmul.f32 %v327, %v327
    %v355 = vmul.f32 %v330, %v330
    %v356 = vmul.f32 %v332, %v332
    %v357 = vadd.f32 %v349, %v350
    %v358 = vadd.f32 %v357, %v351
    %v359 = vadd.f32 %v358, %v352
    %v360 = vadd.f32 %v359, %v353
    %v361 = vadd.f32 %v360, %v354
    %v362 = vadd.f32 %v361, %v355
    %v363 = vadd.f32 %v362, %v356
    %v364 = vrot.slane %v363, 4
    %v365 = vadd.f32 %v363, %v364
    %v366 = vrot.slane %v365, 2
    %v367 = vadd.f32 %v365, %v366
    %v368 = vrot.slane %v367, 1
    %v369 = vadd.f32 %v367, %v368
    %v370 = vmul.f32 %v348, 0.015625
    %v371 = vmul.f32 %v369, 0.015625
    %v372 = vmul.f32 %v370, %v370
    %v373 = vsub.f32 %v371, %v372
    %v374 = vmax.f32 %v373, 0.0
    %v375 = vadd.f32 %v374, 1e-05
    %v376 = vrsqrt.pop %v375
    %v377 = vmul.f32 %v376, %v375
    %v378 = vmul.f32 %v377, %v376
    %v379 = vmul.f32 0.5, %v378
    %v380 = vsub.f32 1.5, %v379
    %v381 = vmul.f32 %v376, %v380
    %vm382 = vweird.f32 %v375
    %vm383 = vweird.f32 %v376
    %vm384 = vmor %vm382, %vm383
    %v385 = vsel %vm384, %v376, %v381
    %v386 = vmul.f32 %v385, %v335
    %v387 = vmul.f32 %v370, %v386
    %v389 = vrot.slane %v387, 7
    %v391 = vsub.f32 %v335, %v389
    %v392 = vperm.slane %v386, 0
    %v393 = vmul.f32 %v315, %v392
    %v394 = vmul.f32 %v317, %v392
    %v395 = vmul.f32 %v320, %v392
    %v396 = vmul.f32 %v322, %v392
    %v397 = vmul.f32 %v325, %v392
    %v398 = vmul.f32 %v327, %v392
    %v399 = vmul.f32 %v330, %v392
    %v400 = vmul.f32 %v332, %v392
    %v401 = vperm.slane %v391, 1
    %v402 = vadd.f32 %v393, %v401
    %v403 = vadd.f32 %v394, %v401
    %v404 = vadd.f32 %v395, %v401
    %v405 = vadd.f32 %v396, %v401
    %v406 = vadd.f32 %v397, %v401
    %v407 = vadd.f32 %v398, %v401
    %v408 = vadd.f32 %v399, %v401
    %v409 = vadd.f32 %v400, %v401
    %v410 = vmax.f32 %v402, 0.0
    %v411 = vmax.f32 %v403, 0.0
    %v412 = vmax.f32 %v404, 0.0
    %v413 = vmax.f32 %v405, 0.0
    %v414 = vmax.f32 %v406, 0.0
    %v415 = vmax.f32 %v407, 0.0
    %v416 = vmax.f32 %v408, 0.0
    %v417 = vmax.f32 %v409, 0.0
    %v418 = vpack.c.bf16 %v411, %v410
    %v419 = vpack.c.bf16 %v413, %v412
    %v420 = vpack.c.bf16 %v415, %v414
    %v421 = vpack.c.bf16 %v417, %v416
    %v422 = vld [vmem:[#allocation2 + $0xd0] sm:$0xf]
    %v423 = vunpack.c.l.bf16 %v422
    %v424 = vld [vmem:[#allocation2 + $0x90] sm:$0xf]
    %v425 = vld [vmem:[#allocation2 + $0x94] sm:$0xf]
    %v426 = vld [vmem:[#allocation2 + $0x98] sm:$0xf]
    %v427 = vld [vmem:[#allocation2 + $0x9c] sm:$0xf]
    %v428 = vld [vmem:[#allocation2 + $0xa0] sm:$0xf]
    %v429 = vld [vmem:[#allocation2 + $0xa4] sm:$0xf]
    %v430 = vld [vmem:[#allocation2 + $0xa8] sm:$0xf]
    %v431 = vld [vmem:[#allocation2 + $0xac] sm:$0xf]
    %v432 = vld [vmem:[#allocation2 + $0xb0] sm:$0xf]
    %v433 = vld [vmem:[#allocation2 + $0xb4] sm:$0xf]
    %v434 = vld [vmem:[#allocation2 + $0xb8] sm:$0xf]
    %v435 = vld [vmem:[#allocation2 + $0xbc] sm:$0xf]
    %v436 = vld [vmem:[#allocation2 + $0xc0] sm:$0xf]
    %v437 = vld [vmem:[#allocation2 + $0xc4] sm:$0xf]
    %v438 = vld [vmem:[#allocation2 + $0xc8] sm:$0xf]
    %v439 = vld [vmem:[#allocation2 + $0xcc] sm:$0xf]
    %v440 = vperm.slane %v423, 0
    %v457 = vunpack.c.l.b16 %v424
    %v458 = vunpack.c.l.b16 %v425
    %v459 = vunpack.c.l.b16 %v426
    %v460 = vunpack.c.l.b16 %v427
    %v461 = vunpack.c.l.b16 %v428
    %v462 = vunpack.c.l.b16 %v429
    %v463 = vunpack.c.l.b16 %v430
    %v464 = vunpack.c.l.b16 %v431
    %v465 = vunpack.c.l.b16 %v432
    %v466 = vunpack.c.l.b16 %v433
    %v467 = vunpack.c.l.b16 %v434
    %v468 = vunpack.c.l.b16 %v435
    %v469 = vunpack.c.l.b16 %v436
    %v470 = vunpack.c.l.b16 %v437
    %v471 = vunpack.c.l.b16 %v438
    %v472 = vunpack.c.l.b16 %v439
    %v473 = vpack.c.b16 %v458, %v457
    %v474 = vpack.c.b16 %v460, %v459
    %v475 = vpack.c.b16 %v462, %v461
    %v476 = vpack.c.b16 %v464, %v463
    %v477 = vpack.c.b16 %v466, %v465
    %v478 = vpack.c.b16 %v468, %v467
    %v479 = vpack.c.b16 %v470, %v469
    %v480 = vpack.c.b16 %v472, %v471
    %489 = vmatpush.bf16.msra.mxu0 %v480
    %490 = vmatpush.bf16.msra.mxu0 %v479
    %491 = vmatpush.bf16.msra.mxu0 %v478
    %492 = vmatpush.bf16.msra.mxu0 %v477
    %493 = vmatpush.bf16.msra.mxu0 %v476
    %494 = vmatpush.bf16.msra.mxu0 %v475
    %495 = vmatpush.bf16.msra.mxu0 %v474
    %496 = vmatpush.bf16.msra.mxu0 %v473
    %497 = vmatmul.bf16.gmra.mxu0 %v418
    %v498 = vpop.f32.mrf.mxu0
    %v499 = vadd.f32 %v440, %v498
    %v500 = vpop.f32.mrf.mxu0
    %v501 = vadd.f32 %v440, %v500
    %502 = vmatmul.bf16.gmra.mxu0 %v419
    %v503 = vpop.f32.mrf.mxu0
    %v504 = vadd.f32 %v440, %v503
    %v505 = vpop.f32.mrf.mxu0
    %v506 = vadd.f32 %v440, %v505
    %507 = vmatmul.bf16.gmra.mxu0 %v420
    %v508 = vpop.f32.mrf.mxu0
    %v509 = vadd.f32 %v440, %v508
    %v510 = vpop.f32.mrf.mxu0
    %v511 = vadd.f32 %v440, %v510
    %512 = vmatmul.bf16.gmra.mxu0 %v421
    %v513 = vpop.f32.mrf.mxu0
    %v514 = vadd.f32 %v440, %v513
    %v515 = vpop.f32.mrf.mxu0
    %v516 = vadd.f32 %v440, %v515
    %517 = vdwg.mxu0
    %518 = vst [vmem:[#allocation5] sm:$0xff] %v499
    %519 = vst [vmem:[#allocation5 + $0x8] sm:$0xff] %v501
    %520 = vst [vmem:[#allocation5 + $0x10] sm:$0xff] %v504
    %521 = vst [vmem:[#allocation5 + $0x18] sm:$0xff] %v506
    %522 = vst [vmem:[#allocation5 + $0x20] sm:$0xff] %v509
    %523 = vst [vmem:[#allocation5 + $0x28] sm:$0xff] %v511
    %524 = vst [vmem:[#allocation5 + $0x30] sm:$0xff] %v514
    %525 = vst [vmem:[#allocation5 + $0x38] sm:$0xff] %v516
    // Predicated region
    $region14: #{mlp_forward.1} parent=1 // pred_check
      _
    $region15: #{mlp_forward.1} parent=1 // pred_check_branch
      %527 = sbr.rel (0) target = $region17
    $region16: #{mlp_forward.1} parent=1 // pred_region
      %529 = vsyncadd [#allocation4], 0
      %s530 = sshll.u32 [#allocation5], 4
      %s531 = int_to_ptr.vmem [resolvable:$true] %s530
      %s532 = sshll.u32 %s2, 4
      %s533 = int_to_ptr.hbm [resolvable:$true] %s532
      %538 = dma.vmem_to_hbm [thread:$0]  %s531, 1024, %s533, [#allocation4], 128, 128, 8
    $region17: #{mlp_forward.1} parent=1 // pred_fallthru
      _
    // Predicated region
    $region18: #{mlp_forward.1} parent=1 // pred_check
      _
    $region19: #{mlp_forward.1} parent=1 // pred_check_branch
      %540 = sbr.rel (0) target = $region21
    $region20: #{mlp_forward.1} parent=1 // pred_region
      %542 = dma.done [#allocation4], 1024
    $region21: #{mlp_forward.1} parent=1 // pred_fallthru
      _
    %543 = vsyncpa [#allocation3], 1
    %544 = vsyncpa [#allocation4], 1

</llo_original>
